<compile_context>
chip_gen: v5e
topology: v5e:2x2
jax: 0.10.0
libtpu: 0.0.40
codegen_flags: <defaults>
</compile_context>

<pallas_src>
import functools

import jax
import jax.numpy as jnp
from jax.experimental import pallas as pl
from jax.experimental.pallas import tpu as pltpu


# ----------------------------- Pallas kernels -----------------------------

def _up_interp_kernel(x_ref, uw_ref, lup_ref, lconv_ref, b_ref, o_ref):
    """nearest / bilinear:  Conv1x1( ReLU( up2(x) ) ) + bias.

    x_ref     : (1, Cin*H,  W)       rows = (channel, image row), cols = image column
    uw_ref    : (W, 2W)              per-axis column resample (right matmul)
    lup_ref   : (Cin*2H, Cin*H)      kron(I_Cin, Uh)   -- per-axis row resample
    lconv_ref : (Cout*2H, Cin*2H)    kron(Wconv, I_2H) -- 1x1 conv over channels
    b_ref     : (Cout*2H, 1)         bias b[o] repeated over the 2H rows of channel o
    o_ref     : (1, Cout*2H, 2W)
    """
    t = jnp.dot(x_ref[0], uw_ref[...], preferred_element_type=jnp.float32)   # (Cin*H, 2W)
    u = jnp.dot(lup_ref[...], t, preferred_element_type=jnp.float32)         # (Cin*2H, 2W)
    r = jnp.maximum(u, 0.0)                                                   # ReLU after up
    y = jnp.dot(lconv_ref[...], r, preferred_element_type=jnp.float32) + b_ref[...]
    o_ref[0] = y.astype(o_ref.dtype)


def _up_convt_kernel(x_ref, a_ref, p_ref, o_ref):
    """convT: Conv1x1( depthwise ConvTranspose2d(k=3, s=2, p=1, op=1)( ReLU(x) ) ).

    out = sum_k  (A_k @ relu(x)) @ P_k
      A_k (Cout*2H, Cin*H): 1x1-conv weight * depthwise taps * row-parity/row-shift placement
      P_k (W, 2W)         : column-parity placement (k=0: kw=1 -> even cols,
                            k=1: kw=2 -> odd cols, k=2: kw=0 with built-in col+1 shift -> odd cols)
    """
    z = jnp.maximum(x_ref[0], 0.0)                                            # (Cin*H, W)
    acc = None
    for k in range(3):                                                        # static unroll
        y = jnp.dot(a_ref[k], z, preferred_element_type=jnp.float32)          # (Cout*2H, W)
        term = jnp.dot(y, p_ref[k], preferred_element_type=jnp.float32)       # (Cout*2H, 2W)
        acc = term if acc is None else acc + term
    o_ref[0] = acc.astype(o_ref.dtype)


# ------------------ constant matrices (built in the wrapper, all tiny) ------------------

def _nearest_1d(n):
    # (2n, n): row 2i+a has a 1 at column i  (nearest-neighbour 2x per axis).
    return jnp.eye(n, dtype=jnp.float32)[jnp.arange(2 * n) // 2]


def _linear_1d(n):
    # (2n, n): 2x linear resampling, half-pixel centers, edge clamp
    # (== F.interpolate(scale_factor=2, mode='bilinear', align_corners=False) per axis).
    ys = jnp.arange(2 * n)
    src = jnp.maximum((ys.astype(jnp.float32) + 0.5) / 2.0 - 0.5, 0.0)
    i0 = jnp.minimum(jnp.floor(src).astype(jnp.int32), n - 1)
    i1 = jnp.minimum(i0 + 1, n - 1)
    f = src - i0.astype(jnp.float32)
    u = jnp.zeros((2 * n, n), jnp.float32)
    u = u.at[ys, i0].add(1.0 - f)
    u = u.at[ys, i1].add(f)
    return u


def _interp_factors(wmat, bias, h, w, mode):
    """Constants for the nearest/bilinear kernel (all O(C^2 H^2) or smaller)."""
    cin = wmat.shape[1]
    u1h = _nearest_1d(h) if mode == "nearest" else _linear_1d(h)          # (2h, h)
    u1w = _nearest_1d(w) if mode == "nearest" else _linear_1d(w)          # (2w, w)
    uw_t = u1w.T                                                          # (w, 2w)
    lup = jnp.kron(jnp.eye(cin, dtype=jnp.float32), u1h)                  # (cin*2h, cin*h)
    lconv = jnp.kron(wmat, jnp.eye(2 * h, dtype=jnp.float32))             # (cout*2h, cin*2h)
    brow = jnp.repeat(bias, 2 * h)[:, None]                               # (cout*2h, 1)
    return uw_t, lup, lconv, brow


def _convt_factors(wc2d, wct, h, w):
    """Fused constants for convT.

    ConvTranspose2d(k=3, s=2, p=1, op=1) output (2i+a, 2j+b) reads, per channel c:
      a=0: kh=1 @ row i            a=1: kh=2 @ row i  and  kh=0 @ row i+1
      b=0: kw=1 @ col j            b=1: kw=2 @ col j  and  kw=0 @ col j+1
    Row structure (parity + shift) and the 1x1 conv are folded into A_k; column
    structure (parity + shift) into P_k.
    """
    cout, cin = wc2d.shape
    f32 = jnp.float32
    ih = jnp.arange(h)
    e0 = jnp.zeros((2 * h, h), f32).at[2 * ih, ih].set(1.0)               # even out row <- row i
    o0 = jnp.zeros((2 * h, h), f32).at[2 * ih + 1, ih].set(1.0)           # odd  out row <- row i
    o1 = jnp.zeros((2 * h, h), f32).at[2 * ih[:-1] + 1, ih[:-1] + 1].set(1.0)  # odd <- row i+1
    taps = wct[:, 0]                                                      # (cin, 3, 3)

    def fused(kw):
        a = jnp.zeros((cout, 2 * h, cin, h), f32)
        for rmat, kh in ((e0, 1), (o0, 2), (o1, 0)):
            a = a + jnp.einsum("oc,c,Ih->oIch", wc2d, taps[:, kh, kw], rmat)
        return a.reshape(cout * 2 * h, cin * h)

    jw = jnp.arange(w)
    pe = jnp.zeros((w, 2 * w), f32).at[jw, 2 * jw].set(1.0)               # col j  -> out col 2j
    po = jnp.zeros((w, 2 * w), f32).at[jw, 2 * jw + 1].set(1.0)           # col j  -> out col 2j+1
    ps = jnp.zeros((w, 2 * w), f32).at[jw[1:], 2 * jw[1:] - 1].set(1.0)   # col j+1 -> out col 2j+1

    amat = jnp.stack([fused(1), fused(2), fused(0)])                      # (3, cout*2h, cin*h)
    pmat = jnp.stack([pe, po, ps])                                        # (3, w, 2w)
    return amat, pmat


# ----------------------------- forward wrapper -----------------------------

def up_forward(x, params, mode):
    """Forward pass of `Up`: NCHW in, NCHW out, 2x spatial upsampling."""
    n, cin, h, w = x.shape
    xf = x.reshape(n, cin * h, w)        # free reshape: (channel, row) on sublanes, col on lanes
    parallel = pltpu.CompilerParams(dimension_semantics=("parallel",))

    if mode in ("nearest", "bilinear"):
        wmat = params["w"][:, :, 0, 0]                       # (Cout, Cin)
        cout = wmat.shape[0]
        uw_t, lup, lconv, brow = _interp_factors(wmat, params["b"], h, w, mode)
        out = pl.pallas_call(
            _up_interp_kernel,
            out_shape=jax.ShapeDtypeStruct((n, cout * 2 * h, 2 * w), jnp.float32),
            grid=(n,),
            in_specs=[
                pl.BlockSpec((1, cin * h, w), lambda i: (i, 0, 0)),
                pl.BlockSpec((w, 2 * w), lambda i: (0, 0)),
                pl.BlockSpec((cin * 2 * h, cin * h), lambda i: (0, 0)),
                pl.BlockSpec((cout * 2 * h, cin * 2 * h), lambda i: (0, 0)),
                pl.BlockSpec((cout * 2 * h, 1), lambda i: (0, 0)),
            ],
            out_specs=pl.BlockSpec((1, cout * 2 * h, 2 * w), lambda i: (i, 0, 0)),
            compiler_params=parallel,
        )(xf, uw_t, lup, lconv, brow)
    elif mode == "convT":
        wc2d = params["wc"][:, :, 0, 0]                      # (Cout, Cin)
        cout = wc2d.shape[0]
        amat, pmat = _convt_factors(wc2d, params["wct"], h, w)
        out = pl.pallas_call(
            _up_convt_kernel,
            out_shape=jax.ShapeDtypeStruct((n, cout * 2 * h, 2 * w), jnp.float32),
            grid=(n,),
            in_specs=[
                pl.BlockSpec((1, cin * h, w), lambda i: (i, 0, 0)),
                pl.BlockSpec((3, cout * 2 * h, cin * h), lambda i: (0, 0, 0)),
                pl.BlockSpec((3, w, 2 * w), lambda i: (0, 0, 0)),
            ],
            out_specs=pl.BlockSpec((1, cout * 2 * h, 2 * w), lambda i: (i, 0, 0)),
            compiler_params=parallel,
        )(xf, amat, pmat)
    else:
        # TODO(synk): other F.interpolate modes (e.g. 'area') are not used by the
        # search space and are not implemented.
        raise ValueError(f"unsupported up mode: {mode!r}")

    return out.reshape(n, cout, 2 * h, 2 * w)


class UpPallas:
    """Thin mirror of the PyTorch `Up` module (mode in {'nearest','bilinear','convT'})."""

    def __init__(self, in_ch, out_ch, mode=None, *, key):
        self.mode = mode
        k0, k1 = jax.random.split(key)
        if mode == "convT":
            self.params = dict(
                wct=0.3 * jax.random.normal(k0, (in_ch, 1, 3, 3), jnp.float32),
                wc=0.3 * jax.random.normal(k1, (out_ch, in_ch, 1, 1), jnp.float32))
        else:
            self.params = dict(
                w=0.3 * jax.random.normal(k0, (out_ch, in_ch, 1, 1), jnp.float32),
                b=0.3 * jax.random.normal(k1, (out_ch,), jnp.float32))

    def __call__(self, x):
        return up_forward(x, self.params, self.mode)


# ----------------------------- pure-JAX reference -----------------------------

def _ref_bilinear_up2(x):
    # matches F.interpolate(scale_factor=2, mode='bilinear', align_corners=False)
    def up_axis(v, axis):
        m = v.shape[axis]
        ys = jnp.arange(2 * m)
        src = jnp.maximum((ys.astype(jnp.float32) + 0.5) / 2.0 - 0.5, 0.0)
        i0 = jnp.minimum(jnp.floor(src).astype(jnp.int32), m - 1)
        i1 = jnp.minimum(i0 + 1, m - 1)
        f = src - i0.astype(jnp.float32)
        shape = [1] * v.ndim
        shape[axis] = 2 * m
        f = f.reshape(shape)
        return jnp.take(v, i0, axis=axis) * (1.0 - f) + jnp.take(v, i1, axis=axis) * f

    return up_axis(up_axis(x, 2), 3)


def _ref_up(x, params, mode):
    hp = jax.lax.Precision.HIGHEST
    if mode == "convT":
        nb, c, h, w = x.shape
        z = jnp.maximum(x, 0.0)
        zd = jnp.zeros((nb, c, 2 * h - 1, 2 * w - 1), x.dtype).at[:, :, ::2, ::2].set(z)
        zd = jnp.pad(zd, ((0, 0), (0, 0), (1, 2), (1, 2)))
        wflip = params["wct"][:, 0, ::-1, ::-1]
        ct = jnp.zeros((nb, c, 2 * h, 2 * w), x.dtype)
        for kh in range(3):
            for kw in range(3):
                ct = ct + (zd[:, :, kh:kh + 2 * h, kw:kw + 2 * w]
                           * wflip[:, kh, kw][None, :, None, None])
        return jnp.einsum("oc,nchw->nohw", params["wc"][:, :, 0, 0], ct, precision=hp)
    up = (jnp.repeat(jnp.repeat(x, 2, axis=2), 2, axis=3) if mode == "nearest"
          else _ref_bilinear_up2(x))
    up = jnp.maximum(up, 0.0)
    y = jnp.einsum("oc,nchw->nohw", params["w"][:, :, 0, 0], up, precision=hp)
    return y + params["b"][None, :, None, None]


# ----------------------------- main -----------------------------

if __name__ == "__main__":
    key = jax.random.PRNGKey(0)
    kx, kn, kb, kc = jax.random.split(key, 4)

    N, Cin, H, W = 2, 4, 16, 16
    Cout = 8

    x = jax.random.normal(kx, (N, Cin, H, W), jnp.float32)

    modules = {
        "nearest": UpPallas(Cin, Cout, mode="nearest", key=kn),
        "bilinear": UpPallas(Cin, Cout, mode="bilinear", key=kb),
        "convT": UpPallas(Cin, Cout, mode="convT", key=kc),
    }

    for mode, mod in modules.items():
        fwd = jax.jit(functools.partial(up_forward, mode=mode))
        y = fwd(x, mod.params)
        jax.block_until_ready(y)
        assert y.shape == (N, Cout, 2 * H, 2 * W), (mode, y.shape)
        assert bool(jnp.all(jnp.isfinite(y))), mode
        y_ref = _ref_up(x, mod.params, mode)
        err = float(jnp.max(jnp.abs(y - y_ref)))
        # Tolerance accounts for the MXU's default (reduced-precision) f32 matmul path;
        # the reference uses Precision.HIGHEST.
        assert err < 2e-2, (mode, err)

    print("KERNEL_OK")
</pallas_src>

<mosaic_0001>
module attributes {stable_mosaic.version = 11 : i64} {
  func.func @_up_interp_kernel(%arg0: i32, %arg1: memref<1x64x16xf32, #tpu.memory_space<vmem>>, %arg2: memref<16x32xf32, #tpu.memory_space<vmem>>, %arg3: memref<128x64xf32, #tpu.memory_space<vmem>>, %arg4: memref<256x128xf32, #tpu.memory_space<vmem>>, %arg5: memref<256x1xf32, #tpu.memory_space<vmem>>, %arg6: memref<1x256x32xf32, #tpu.memory_space<vmem>>) attributes {dimension_semantics = [#tpu.dimension_semantics<parallel>], iteration_bounds = array<i64: 2>, scalar_prefetch = 0 : i64, scratch_operands = 0 : i64, tpu.core_type = #tpu.core_type<tc>, window_params = [{transform_indices = @transform_0, window_bounds = array<i64: 1, 64, 16>}, {pipeline_mode = #tpu.pipeline_mode<synchronous>, transform_indices = @transform_1, window_bounds = array<i64: 16, 32>}, {pipeline_mode = #tpu.pipeline_mode<synchronous>, transform_indices = @transform_2, window_bounds = array<i64: 128, 64>}, {pipeline_mode = #tpu.pipeline_mode<synchronous>, transform_indices = @transform_3, window_bounds = array<i64: 256, 128>}, {pipeline_mode = #tpu.pipeline_mode<synchronous>, transform_indices = @transform_4, window_bounds = array<i64: 256, 1>}, {transform_indices = @transform_5, window_bounds = array<i64: 1, 256, 32>}]} {
    %c0 = arith.constant 0 : index
    %c0_0 = arith.constant 0 : index
    %c0_1 = arith.constant 0 : index
    %0 = vector.load %arg1[%c0, %c0_0, %c0_1] : memref<1x64x16xf32, #tpu.memory_space<vmem>>, vector<1x64x16xf32>
    %1 = vector.shape_cast %0 : vector<1x64x16xf32> to vector<64x16xf32>
    %c0_2 = arith.constant 0 : index
    %c0_3 = arith.constant 0 : index
    %2 = vector.load %arg2[%c0_2, %c0_3] : memref<16x32xf32, #tpu.memory_space<vmem>>, vector<16x32xf32>
    %cst = arith.constant dense<0.000000e+00> : vector<64x32xf32>
    %3 = tpu.matmul %1, %2, %cst {dimension_numbers = #tpu.dot_dimension_numbers<[1], [0], [0], [1], [0, 0, 1, 1], [], []>} : vector<64x16xf32>, vector<16x32xf32>, vector<64x32xf32> -> vector<64x32xf32>
    %c0_4 = arith.constant 0 : index
    %c0_5 = arith.constant 0 : index
    %4 = vector.load %arg3[%c0_4, %c0_5] : memref<128x64xf32, #tpu.memory_space<vmem>>, vector<128x64xf32>
    %cst_6 = arith.constant dense<0.000000e+00> : vector<128x32xf32>
    %5 = tpu.matmul %4, %3, %cst_6 {dimension_numbers = #tpu.dot_dimension_numbers<[1], [0], [0], [1], [0, 0, 1, 1], [], []>} : vector<128x64xf32>, vector<64x32xf32>, vector<128x32xf32> -> vector<128x32xf32>
    %cst_7 = arith.constant 0.000000e+00 : f32
    %6 = vector.broadcast %cst_7 : f32 to vector<128x32xf32>
    %7 = arith.maximumf %5, %6 : vector<128x32xf32>
    %c0_8 = arith.constant 0 : index
    %c0_9 = arith.constant 0 : index
    %8 = vector.load %arg4[%c0_8, %c0_9] : memref<256x128xf32, #tpu.memory_space<vmem>>, vector<256x128xf32>
    %cst_10 = arith.constant dense<0.000000e+00> : vector<256x32xf32>
    %9 = tpu.matmul %8, %7, %cst_10 {dimension_numbers = #tpu.dot_dimension_numbers<[1], [0], [0], [1], [0, 0, 1, 1], [], []>} : vector<256x128xf32>, vector<128x32xf32>, vector<256x32xf32> -> vector<256x32xf32>
    %c0_11 = arith.constant 0 : index
    %c0_12 = arith.constant 0 : index
    %10 = vector.load %arg5[%c0_11, %c0_12] : memref<256x1xf32, #tpu.memory_space<vmem>>, vector<256x1xf32>
    %11 = vector.broadcast %10 : vector<256x1xf32> to vector<256x32xf32>
    %12 = arith.addf %9, %11 : vector<256x32xf32>
    %c0_13 = arith.constant 0 : index
    %c0_14 = arith.constant 0 : index
    %c0_15 = arith.constant 0 : index
    %13 = vector.load %arg6[%c0_13, %c0_14, %c0_15] : memref<1x256x32xf32, #tpu.memory_space<vmem>>, vector<1x256x32xf32>
    %14 = vector.shape_cast %13 : vector<1x256x32xf32> to vector<256x32xf32>
    %15 = vector.shape_cast %12 : vector<256x32xf32> to vector<1x256x32xf32>
    tpu.vector_store %arg6[%c0_13, %c0_14, %c0_15], %15 {strides = array<i32>} : memref<1x256x32xf32, #tpu.memory_space<vmem>>, vector<1x256x32xf32>,
    return
  }
  func.func @transform_0(%arg0: i32) -> (i32, i32, i32) {
    %c0_i32 = arith.constant 0 : i32
    %c0_i32_0 = arith.constant 0 : i32
    %c0_i32_1 = arith.constant 0 : i32
    return %arg0, %c0_i32, %c0_i32_0 : i32, i32, i32
  }
  func.func @transform_1(%arg0: i32) -> (i32, i32) {
    %c0_i32 = arith.constant 0 : i32
    %c0_i32_0 = arith.constant 0 : i32
    %c0_i32_1 = arith.constant 0 : i32
    return %c0_i32, %c0_i32_0 : i32, i32
  }
  func.func @transform_2(%arg0: i32) -> (i32, i32) {
    %c0_i32 = arith.constant 0 : i32
    %c0_i32_0 = arith.constant 0 : i32
    %c0_i32_1 = arith.constant 0 : i32
    return %c0_i32, %c0_i32_0 : i32, i32
  }
  func.func @transform_3(%arg0: i32) -> (i32, i32) {
    %c0_i32 = arith.constant 0 : i32
    %c0_i32_0 = arith.constant 0 : i32
    %c0_i32_1 = arith.constant 0 : i32
    return %c0_i32, %c0_i32_0 : i32, i32
  }
  func.func @transform_4(%arg0: i32) -> (i32, i32) {
    %c0_i32 = arith.constant 0 : i32
    %c0_i32_0 = arith.constant 0 : i32
    %c0_i32_1 = arith.constant 0 : i32
    return %c0_i32, %c0_i32_0 : i32, i32
  }
  func.func @transform_5(%arg0: i32) -> (i32, i32, i32) {
    %c0_i32 = arith.constant 0 : i32
    %c0_i32_0 = arith.constant 0 : i32
    %c0_i32_1 = arith.constant 0 : i32
    return %arg0, %c0_i32, %c0_i32_0 : i32, i32, i32
  }
}

</mosaic_0001>

<llo_original>
// kernel: up_forward.1
$region0: #{up_forward.1}
  #allocation0 [shape = 'u32[]', space=smem, size = 0x4, offset = 0x4, fixed_abs, tag = 'smem constant byte address 0x4 - core index']
  #allocation1 [shape = 'u32[72,128]{1,0:T(1,128)}', space=vmem, size = 0x9000, scoped, tag = 'internal scratch']
  %s0 = inlined_call_operand.vmem [shape: f32[2,64,16], index: 0, kind: input, shape index: {}]
  %s1 = inlined_call_operand.vmem [shape: f32[16,32], index: 1, kind: input, shape index: {}]
  %s2 = inlined_call_operand.vmem [shape: f32[128,64], index: 2, kind: input, shape index: {}]
  %s3 = inlined_call_operand.vmem [shape: f32[256,128], index: 3, kind: input, shape index: {}]
  %s4 = inlined_call_operand.vmem [shape: f32[256,1], index: 4, kind: input, shape index: {}]
  %s5 = inlined_call_operand.hbm [shape: f32[2,256,32], index: 5, kind: output, shape index: {}]
  %s6 = sld [smem:[#allocation0]]
  $region53: #{up_forward.1} parent=0
    _
  %s8 = ssub.s32 1, %s6
  %s9 = scalar_select 0, %s8, %s6
  $region1: #{up_forward.1} parent=0
    #allocation2 [shape = 'u8[262144]{0}', space=vmem, size = 0x40000, scoped, tag = 'output window, operand 0']
    #allocation3 [shape = 's32[2]{0}', space=sflag, size = 0x8, scoped, tag = 'scoped memory for up_forward.1']
    %10 = vsyncpa [#allocation3], 0
    %s11 = scalar_lea.sflag [#allocation3], 1
    %12 = vsyncpa %s11, 0
    loop: start=0, step=1, limit=4
    $region2: #{up_forward.1} parent=1 // loop_pre_header
      _
    $region3: #{up_forward.1} parent=1 // loop_header
      %s14 = sphi 0, %s18
      %p15 = scmp.ge.s32.totalorder %s14, 4
      %s24 = sphi 0, %s26
      %s27 = sphi 0, %s24
      %s28 = sphi 0, %s27
      %s44 = sphi 0, %s28
      %s48 = sphi 0, %s48
      %s50 = sphi 0, %s48
      %s51 = sphi 0, %s50
      %s65 = sphi 0, %s51
      %s69 = sphi 0, %s69
      %s71 = sphi 0, %s69
      %s72 = sphi 0, %s71
      %s86 = sphi 0, %s72
      %s90 = sphi 0, %s90
      %s92 = sphi 0, %s90
      %s93 = sphi 0, %s92
      %s107 = sphi 0, %s93
      %s111 = sphi 0, %s111
      %s113 = sphi 0, %s111
      %s114 = sphi 0, %s113
      %s128 = sphi 0, %s114
      %s134 = sphi 0, %s136
      %s137 = sphi 0, %s134
      %s138 = sphi 0, %s137
      %s154 = sphi 0, %s138
    $region4: #{up_forward.1} parent=1 // loop_header_branch
      %17 = sbr.rel (%p15) target = $region8
    $region5: #{up_forward.1} parent=1 // loop_body
      %s19 = ssub.s32 %s14, 1
      %s20 = ssub.s32 %s14, 2
      %s21 = sadd.s32 %s14, 1
      %s22 = ssub.s32 %s14, %s21
      %p23 = scmp.eq.s32.totalorder %s22, 0
      %s25 = sadd.s32 %s24, 1
      %s26 = scalar_select %p23, %s24, %s25
      %p29 = pneg %p23
      %p30 = scmp.eq.s32.totalorder %s14, 1
      %p31 = por %p29, %p30
      %p32 = scmp.ne.s32.totalorder %s24, %s27
      %p33 = scmp.eq.s32.totalorder %s14, 0
      %p34 = por %p32, %p33
      %p35 = scmp.ne.s32.totalorder %s24, %s27
      %p36 = scmp.eq.s32.totalorder %s19, 1
      %p37 = por %p35, %p36
      %p38 = scmp.ne.s32.totalorder %s27, %s28
      %p39 = scmp.eq.s32.totalorder %s19, 0
      %p40 = por %p38, %p39
      %p41 = scmp.ne.s32.totalorder %s27, %s28
      %p42 = scmp.eq.s32.totalorder %s20, 1
      %p43 = por %p41, %p42
      %p45 = scmp.ne.s32.totalorder %s28, %s44
      %p46 = scmp.eq.s32.totalorder %s20, 0
      %p47 = por %p45, %p46
      %s49 = sadd.s32 %s48, 1
      %p52 = scmp.eq.s32.totalorder %s14, 1
      %p53 = scmp.ne.s32.totalorder %s48, %s50
      %p54 = scmp.eq.s32.totalorder %s14, 0
      %p55 = por %p53, %p54
      %p56 = scmp.ne.s32.totalorder %s48, %s50
      %p57 = scmp.eq.s32.totalorder %s19, 1
      %p58 = por %p56, %p57
      %p59 = scmp.ne.s32.totalorder %s50, %s51
      %p60 = scmp.eq.s32.totalorder %s19, 0
      %p61 = por %p59, %p60
      %p62 = scmp.ne.s32.totalorder %s50, %s51
      %p63 = scmp.eq.s32.totalorder %s20, 1
      %p64 = por %p62, %p63
      %p66 = scmp.ne.s32.totalorder %s51, %s65
      %p67 = scmp.eq.s32.totalorder %s20, 0
      %p68 = por %p66, %p67
      %s70 = sadd.s32 %s69, 1
      %p73 = scmp.eq.s32.totalorder %s14, 1
      %p74 = scmp.ne.s32.totalorder %s69, %s71
      %p75 = scmp.eq.s32.totalorder %s14, 0
      %p76 = por %p74, %p75
      %p77 = scmp.ne.s32.totalorder %s69, %s71
      %p78 = scmp.eq.s32.totalorder %s19, 1
      %p79 = por %p77, %p78
      %p80 = scmp.ne.s32.totalorder %s71, %s72
      %p81 = scmp.eq.s32.totalorder %s19, 0
      %p82 = por %p80, %p81
      %p83 = scmp.ne.s32.totalorder %s71, %s72
      %p84 = scmp.eq.s32.totalorder %s20, 1
      %p85 = por %p83, %p84
      %p87 = scmp.ne.s32.totalorder %s72, %s86
      %p88 = scmp.eq.s32.totalorder %s20, 0
      %p89 = por %p87, %p88
      %s91 = sadd.s32 %s90, 1
      %p94 = scmp.eq.s32.totalorder %s14, 1
      %p95 = scmp.ne.s32.totalorder %s90, %s92
      %p96 = scmp.eq.s32.totalorder %s14, 0
      %p97 = por %p95, %p96
      %p98 = scmp.ne.s32.totalorder %s90, %s92
      %p99 = scmp.eq.s32.totalorder %s19, 1
      %p100 = por %p98, %p99
      %p101 = scmp.ne.s32.totalorder %s92, %s93
      %p102 = scmp.eq.s32.totalorder %s19, 0
      %p103 = por %p101, %p102
      %p104 = scmp.ne.s32.totalorder %s92, %s93
      %p105 = scmp.eq.s32.totalorder %s20, 1
      %p106 = por %p104, %p105
      %p108 = scmp.ne.s32.totalorder %s93, %s107
      %p109 = scmp.eq.s32.totalorder %s20, 0
      %p110 = por %p108, %p109
      %s112 = sadd.s32 %s111, 1
      %p115 = scmp.eq.s32.totalorder %s14, 1
      %p116 = scmp.ne.s32.totalorder %s111, %s113
      %p117 = scmp.eq.s32.totalorder %s14, 0
      %p118 = por %p116, %p117
      %p119 = scmp.ne.s32.totalorder %s111, %s113
      %p120 = scmp.eq.s32.totalorder %s19, 1
      %p121 = por %p119, %p120
      %p122 = scmp.ne.s32.totalorder %s113, %s114
      %p123 = scmp.eq.s32.totalorder %s19, 0
      %p124 = por %p122, %p123
      %p125 = scmp.ne.s32.totalorder %s113, %s114
      %p126 = scmp.eq.s32.totalorder %s20, 1
      %p127 = por %p125, %p126
      %p129 = scmp.ne.s32.totalorder %s114, %s128
      %p130 = scmp.eq.s32.totalorder %s20, 0
      %p131 = por %p129, %p130
      %s132 = ssub.s32 %s14, %s21
      %p133 = scmp.eq.s32.totalorder %s132, 0
      %s135 = sadd.s32 %s134, 1
      %s136 = scalar_select %p133, %s134, %s135
      %p139 = pneg %p133
      %p140 = scmp.eq.s32.totalorder %s14, 1
      %p141 = por %p139, %p140
      %p142 = scmp.ne.s32.totalorder %s134, %s137
      %p143 = scmp.eq.s32.totalorder %s14, 0
      %p144 = por %p142, %p143
      %p145 = scmp.ne.s32.totalorder %s134, %s137
      %p146 = scmp.eq.s32.totalorder %s19, 1
      %p147 = por %p145, %p146
      %p148 = scmp.ne.s32.totalorder %s137, %s138
      %p149 = scmp.eq.s32.totalorder %s19, 0
      %p150 = por %p148, %p149
      %p151 = scmp.ne.s32.totalorder %s137, %s138
      %p152 = scmp.eq.s32.totalorder %s20, 1
      %p153 = por %p151, %p152
      %p155 = scmp.ne.s32.totalorder %s138, %s154
      %p156 = scmp.eq.s32.totalorder %s20, 0
      %p157 = por %p155, %p156
      %p158 = scmp.le.s32.totalorder 1, %s14
      %p159 = scmp.lt.s32.totalorder %s14, 3
      %p160 = pnand %p158, %p159
      %p161 = pneg %p160
      // Predicated region
      $region9: #{up_forward.1} parent=5 // pred_check
        _
      $region10: #{up_forward.1} parent=5 // pred_check_branch
        %163 = sbr.rel (%p160) target = $region12
      $region11: #{up_forward.1} parent=5 // pred_region
        %s164 = ssub.s32 %s14, 1
        // Predicated region
        $region13: #{up_forward.1} parent=11 // pred_check
          %p165 = pneg %p61
        $region14: #{up_forward.1} parent=11 // pred_check_branch
          %167 = sbr.rel (%p165) target = $region16
        $region15: #{up_forward.1} parent=11 // pred_region
          _
        $region16: #{up_forward.1} parent=11 // pred_fallthru
          _
        // Predicated region
        $region17: #{up_forward.1} parent=11 // pred_check
          %p168 = pneg %p82
        $region18: #{up_forward.1} parent=11 // pred_check_branch
          %170 = sbr.rel (%p168) target = $region20
        $region19: #{up_forward.1} parent=11 // pred_region
          _
        $region20: #{up_forward.1} parent=11 // pred_fallthru
          _
        // Predicated region
        $region21: #{up_forward.1} parent=11 // pred_check
          %p171 = pneg %p103
        $region22: #{up_forward.1} parent=11 // pred_check_branch
          %173 = sbr.rel (%p171) target = $region24
        $region23: #{up_forward.1} parent=11 // pred_region
          _
        $region24: #{up_forward.1} parent=11 // pred_fallthru
          _
        // Predicated region
        $region25: #{up_forward.1} parent=11 // pred_check
          %p174 = pneg %p124
        $region26: #{up_forward.1} parent=11 // pred_check_branch
          %176 = sbr.rel (%p174) target = $region28
        $region27: #{up_forward.1} parent=11 // pred_region
          _
        $region28: #{up_forward.1} parent=11 // pred_fallthru
          _
      $region12: #{up_forward.1} parent=5 // pred_fallthru
        _
      %p177 = scmp.lt.s32.totalorder %s14, 2
      // Predicated region
      $region29: #{up_forward.1} parent=5 // pred_check
        %p178 = pneg %p177
      $region30: #{up_forward.1} parent=5 // pred_check_branch
        %180 = sbr.rel (%p178) target = $region32
      $region31: #{up_forward.1} parent=5 // pred_region
        // Predicated region
        $region33: #{up_forward.1} parent=31 // pred_check
          %p181 = pneg %p34
        $region34: #{up_forward.1} parent=31 // pred_check_branch
          %183 = sbr.rel (%p181) target = $region36
        $region35: #{up_forward.1} parent=31 // pred_region
          %p184 = scmp.lt.s32.totalorder %s14, 1
          %s185 = scalar_select %p184, %s14, 1
          %s186 = smul.addr %s185, 8
          %s187 = smul.addr %s186, 8
          %s188 = scalar_lea.vmem %s0, %s187
        $region36: #{up_forward.1} parent=31 // pred_fallthru
          _
      $region32: #{up_forward.1} parent=5 // pred_fallthru
        _
      %p189 = scmp.le.s32.totalorder 1, %s14
      %p190 = scmp.lt.s32.totalorder %s14, 3
      %p191 = pnand %p189, %p190
      %p192 = pneg %p191
      // Predicated region
      $region37: #{up_forward.1} parent=5 // pred_check
        _
      $region38: #{up_forward.1} parent=5 // pred_check_branch
        %194 = sbr.rel (%p191) target = $region40
      $region39: #{up_forward.1} parent=5 // pred_region
        %s195 = ssub.s32 %s14, 1
        %p196 = scmp.lt.s32.totalorder %s19, 1
        %s197 = scalar_select %p196, %s19, 1
        %s198 = smul.addr %s197, 8
        %s199 = smul.addr %s198, 8
        %s200 = scalar_lea.vmem %s0, %s199
        %p201 = pneg %p40
        %p202 = pneg %p37
        %p203 = pneg %p61
        %p204 = pneg %p58
        %p205 = pneg %p82
        %p206 = pneg %p79
        %p207 = pneg %p103
        %p208 = pneg %p100
        %p209 = pneg %p124
        %p210 = pneg %p121
        %p211 = pneg %p150
        %p212 = pneg %p147
        %s213 = sand.u32 %s137, 1
        %s214 = scalar_lea.sflag [#allocation3], %s213
        %s215 = sand.u32 %s137, 1
        %s216 = smul.addr %s215, 256
        %s217 = scalar_lea.vmem [#allocation2], %s216
        %p218 = scmp.lt.s32.totalorder %s19, 1
        %s219 = scalar_select %p218, %s19, 1
        %s220 = smul.addr %s219, 8
        %s221 = smul.addr %s220, 8
        %s222 = scalar_lea.vmem %s0, %s221
        %v223 = vld [vmem:[%s222] sm:$0xff]
        %v224 = vld [vmem:[%s222 + $0x8] sm:$0xff]
        %v225 = vld [vmem:[%s222 + $0x10] sm:$0xff]
        %v226 = vld [vmem:[%s222 + $0x18] sm:$0xff]
        %v227 = vld [vmem:[%s222 + $0x20] sm:$0xff]
        %v228 = vld [vmem:[%s222 + $0x28] sm:$0xff]
        %v229 = vld [vmem:[%s222 + $0x30] sm:$0xff]
        %v230 = vld [vmem:[%s222 + $0x38] sm:$0xff]
        %v231 = vld [vmem:[%s1] sm:$0xff]
        %v232 = vld [vmem:[%s1 + $0x8] sm:$0xff]
        %vm233 = vcmask 130048
        %v235 = vsel %vm233, %v223, 0
        %v238 = vsel %vm233, %v224, 0
        %v241 = vsel %vm233, %v225, 0
        %v244 = vsel %vm233, %v226, 0
        %v247 = vsel %vm233, %v227, 0
        %v250 = vsel %vm233, %v228, 0
        %v253 = vsel %vm233, %v229, 0
        %v256 = vsel %vm233, %v230, 0
        %258 = vmatpush.msra.mxu0 0.0
        %259 = vmatpush.msra.mxu0 0.0
        %260 = vmatpush.msra.mxu0 0.0
        %261 = vmatpush.msra.mxu0 0.0
        %262 = vmatpush.msra.mxu0 0.0
        %263 = vmatpush.msra.mxu0 0.0
        %264 = vmatpush.msra.mxu0 0.0
        %265 = vmatpush.msra.mxu0 0.0
        %266 = vmatpush.msra.mxu0 0.0
        %267 = vmatpush.msra.mxu0 0.0
        %268 = vmatpush.msra.mxu0 0.0
        %269 = vmatpush.msra.mxu0 0.0
        %270 = vmatpush.msra.mxu0 0.0
        %271 = vmatpush.msra.mxu0 0.0
        %272 = vmatpush.msra.mxu0 %v232
        %273 = vmatpush.msra.mxu0 %v231
        %274 = vmatmul.f32.gmra.mxu0 %v235
        %v275 = vpop.f32.mrf.mxu0
        %v276 = vadd.f32 0.0, %v275
        %277 = vmatmul.f32.gmra.mxu0 %v238
        %v278 = vpop.f32.mrf.mxu0
        %v279 = vadd.f32 0.0, %v278
        %280 = vmatmul.f32.gmra.mxu0 %v241
        %v281 = vpop.f32.mrf.mxu0
        %v282 = vadd.f32 0.0, %v281
        %283 = vmatmul.f32.gmra.mxu0 %v244
        %v284 = vpop.f32.mrf.mxu0
        %v285 = vadd.f32 0.0, %v284
        %286 = vmatmul.f32.gmra.mxu0 %v247
        %v287 = vpop.f32.mrf.mxu0
        %v288 = vadd.f32 0.0, %v287
        %289 = vmatmul.f32.gmra.mxu0 %v250
        %v290 = vpop.f32.mrf.mxu0
        %v291 = vadd.f32 0.0, %v290
        %292 = vmatmul.f32.gmra.mxu0 %v253
        %v293 = vpop.f32.mrf.mxu0
        %v294 = vadd.f32 0.0, %v293
        %295 = vmatmul.f32.gmra.mxu0 %v256
        %v296 = vpop.f32.mrf.mxu0
        %v297 = vadd.f32 0.0, %v296
        %298 = vdwg.mxu0
        %v299 = vld [vmem:[%s2] sm:$0xff]
        %v300 = vld [vmem:[%s2 + $0x8] sm:$0xff]
        %v301 = vld [vmem:[%s2 + $0x10] sm:$0xff]
        %v302 = vld [vmem:[%s2 + $0x18] sm:$0xff]
        %v303 = vld [vmem:[%s2 + $0x20] sm:$0xff]
        %v304 = vld [vmem:[%s2 + $0x28] sm:$0xff]
        %v305 = vld [vmem:[%s2 + $0x30] sm:$0xff]
        %v306 = vld [vmem:[%s2 + $0x38] sm:$0xff]
        %v307 = vld [vmem:[%s2 + $0x40] sm:$0xff]
        %v308 = vld [vmem:[%s2 + $0x48] sm:$0xff]
        %v309 = vld [vmem:[%s2 + $0x50] sm:$0xff]
        %v310 = vld [vmem:[%s2 + $0x58] sm:$0xff]
        %v311 = vld [vmem:[%s2 + $0x60] sm:$0xff]
        %v312 = vld [vmem:[%s2 + $0x68] sm:$0xff]
        %v313 = vld [vmem:[%s2 + $0x70] sm:$0xff]
        %v314 = vld [vmem:[%s2 + $0x78] sm:$0xff]
        %vm315 = vcmask 523264
        %v317 = vsel %vm315, %v299, 0
        %v320 = vsel %vm315, %v300, 0
        %v323 = vsel %vm315, %v301, 0
        %v326 = vsel %vm315, %v302, 0
        %v329 = vsel %vm315, %v303, 0
        %v332 = vsel %vm315, %v304, 0
        %v335 = vsel %vm315, %v305, 0
        %v338 = vsel %vm315, %v306, 0
        %v341 = vsel %vm315, %v307, 0
        %v344 = vsel %vm315, %v308, 0
        %v347 = vsel %vm315, %v309, 0
        %v350 = vsel %vm315, %v310, 0
        %v353 = vsel %vm315, %v311, 0
        %v356 = vsel %vm315, %v312, 0
        %v359 = vsel %vm315, %v313, 0
        %v362 = vsel %vm315, %v314, 0
        %364 = vmatpush.msra.mxu0 0.0
        %365 = vmatpush.msra.mxu0 0.0
        %366 = vmatpush.msra.mxu0 0.0
        %367 = vmatpush.msra.mxu0 0.0
        %368 = vmatpush.msra.mxu0 0.0
        %369 = vmatpush.msra.mxu0 0.0
        %370 = vmatpush.msra.mxu0 0.0
        %371 = vmatpush.msra.mxu0 0.0
        %372 = vmatpush.msra.mxu0 %v297
        %373 = vmatpush.msra.mxu0 %v294
        %374 = vmatpush.msra.mxu0 %v291
        %375 = vmatpush.msra.mxu0 %v288
        %376 = vmatpush.msra.mxu0 %v285
        %377 = vmatpush.msra.mxu0 %v282
        %378 = vmatpush.msra.mxu0 %v279
        %379 = vmatpush.msra.mxu0 %v276
        %380 = vmatmul.f32.gmra.mxu0 %v317
        %v381 = vpop.f32.mrf.mxu0
        %v382 = vadd.f32 0.0, %v381
        %383 = vmatmul.f32.gmra.mxu0 %v320
        %v384 = vpop.f32.mrf.mxu0
        %v385 = vadd.f32 0.0, %v384
        %386 = vmatmul.f32.gmra.mxu0 %v323
        %v387 = vpop.f32.mrf.mxu0
        %v388 = vadd.f32 0.0, %v387
        %389 = vmatmul.f32.gmra.mxu0 %v326
        %v390 = vpop.f32.mrf.mxu0
        %v391 = vadd.f32 0.0, %v390
        %392 = vmatmul.f32.gmra.mxu0 %v329
        %v393 = vpop.f32.mrf.mxu0
        %v394 = vadd.f32 0.0, %v393
        %395 = vmatmul.f32.gmra.mxu0 %v332
        %v396 = vpop.f32.mrf.mxu0
        %v397 = vadd.f32 0.0, %v396
        %398 = vmatmul.f32.gmra.mxu0 %v335
        %v399 = vpop.f32.mrf.mxu0
        %v400 = vadd.f32 0.0, %v399
        %401 = vmatmul.f32.gmra.mxu0 %v338
        %v402 = vpop.f32.mrf.mxu0
        %v403 = vadd.f32 0.0, %v402
        %404 = vmatmul.f32.gmra.mxu0 %v341
        %v405 = vpop.f32.mrf.mxu0
        %v406 = vadd.f32 0.0, %v405
        %407 = vmatmul.f32.gmra.mxu0 %v344
        %v408 = vpop.f32.mrf.mxu0
        %v409 = vadd.f32 0.0, %v408
        %410 = vmatmul.f32.gmra.mxu0 %v347
        %v411 = vpop.f32.mrf.mxu0
        %v412 = vadd.f32 0.0, %v411
        %413 = vmatmul.f32.gmra.mxu0 %v350
        %v414 = vpop.f32.mrf.mxu0
        %v415 = vadd.f32 0.0, %v414
        %416 = vmatmul.f32.gmra.mxu0 %v353
        %v417 = vpop.f32.mrf.mxu0
        %v418 = vadd.f32 0.0, %v417
        %419 = vmatmul.f32.gmra.mxu0 %v356
        %v420 = vpop.f32.mrf.mxu0
        %v421 = vadd.f32 0.0, %v420
        %422 = vmatmul.f32.gmra.mxu0 %v359
        %v423 = vpop.f32.mrf.mxu0
        %v424 = vadd.f32 0.0, %v423
        %425 = vmatmul.f32.gmra.mxu0 %v362
        %v426 = vpop.f32.mrf.mxu0
        %v427 = vadd.f32 0.0, %v426
        %428 = vdwg.mxu0
        %v429 = vmax.f32 %v382, 0.0
        %v430 = vmax.f32 %v385, 0.0
        %v431 = vmax.f32 %v388, 0.0
        %v432 = vmax.f32 %v391, 0.0
        %v433 = vmax.f32 %v394, 0.0
        %v434 = vmax.f32 %v397, 0.0
        %v435 = vmax.f32 %v400, 0.0
        %v436 = vmax.f32 %v403, 0.0
        %v437 = vmax.f32 %v406, 0.0
        %v438 = vmax.f32 %v409, 0.0
        %v439 = vmax.f32 %v412, 0.0
        %v440 = vmax.f32 %v415, 0.0
        %v441 = vmax.f32 %v418, 0.0
        %v442 = vmax.f32 %v421, 0.0
        %v443 = vmax.f32 %v424, 0.0
        %v444 = vmax.f32 %v427, 0.0
        %v445 = vld [vmem:[%s3] sm:$0xff]
        %v446 = vld [vmem:[%s3 + $0x8] sm:$0xff]
        %v447 = vld [vmem:[%s3 + $0x10] sm:$0xff]
        %v448 = vld [vmem:[%s3 + $0x18] sm:$0xff]
        %v449 = vld [vmem:[%s3 + $0x20] sm:$0xff]
        %v450 = vld [vmem:[%s3 + $0x28] sm:$0xff]
        %v451 = vld [vmem:[%s3 + $0x30] sm:$0xff]
        %v452 = vld [vmem:[%s3 + $0x38] sm:$0xff]
        %v453 = vld [vmem:[%s3 + $0x40] sm:$0xff]
        %v454 = vld [vmem:[%s3 + $0x48] sm:$0xff]
        %v455 = vld [vmem:[%s3 + $0x50] sm:$0xff]
        %v456 = vld [vmem:[%s3 + $0x58] sm:$0xff]
        %v457 = vld [vmem:[%s3 + $0x60] sm:$0xff]
        %v458 = vld [vmem:[%s3 + $0x68] sm:$0xff]
        %v459 = vld [vmem:[%s3 + $0x70] sm:$0xff]
        %v460 = vld [vmem:[%s3 + $0x78] sm:$0xff]
        %v461 = vld [vmem:[%s3 + $0x80] sm:$0xff]
        %v462 = vld [vmem:[%s3 + $0x88] sm:$0xff]
        %v463 = vld [vmem:[%s3 + $0x90] sm:$0xff]
        %v464 = vld [vmem:[%s3 + $0x98] sm:$0xff]
        %v465 = vld [vmem:[%s3 + $0xa0] sm:$0xff]
        %v466 = vld [vmem:[%s3 + $0xa8] sm:$0xff]
        %v467 = vld [vmem:[%s3 + $0xb0] sm:$0xff]
        %v468 = vld [vmem:[%s3 + $0xb8] sm:$0xff]
        %v469 = vld [vmem:[%s3 + $0xc0] sm:$0xff]
        %v470 = vld [vmem:[%s3 + $0xc8] sm:$0xff]
        %v471 = vld [vmem:[%s3 + $0xd0] sm:$0xff]
        %v472 = vld [vmem:[%s3 + $0xd8] sm:$0xff]
        %v473 = vld [vmem:[%s3 + $0xe0] sm:$0xff]
        %v474 = vld [vmem:[%s3 + $0xe8] sm:$0xff]
        %v475 = vld [vmem:[%s3 + $0xf0] sm:$0xff]
        %v476 = vld [vmem:[%s3 + $0xf8] sm:$0xff]
        %v477 = vld [vmem:[%s4] sm:$0xff]
        %v478 = vld [vmem:[%s4 + $0x8] sm:$0xff]
        %v479 = vld [vmem:[%s4 + $0x10] sm:$0xff]
        %v480 = vld [vmem:[%s4 + $0x18] sm:$0xff]
        %v481 = vld [vmem:[%s4 + $0x20] sm:$0xff]
        %v482 = vld [vmem:[%s4 + $0x28] sm:$0xff]
        %v483 = vld [vmem:[%s4 + $0x30] sm:$0xff]
        %v484 = vld [vmem:[%s4 + $0x38] sm:$0xff]
        %v485 = vld [vmem:[%s4 + $0x40] sm:$0xff]
        %v486 = vld [vmem:[%s4 + $0x48] sm:$0xff]
        %v487 = vld [vmem:[%s4 + $0x50] sm:$0xff]
        %v488 = vld [vmem:[%s4 + $0x58] sm:$0xff]
        %v489 = vld [vmem:[%s4 + $0x60] sm:$0xff]
        %v490 = vld [vmem:[%s4 + $0x68] sm:$0xff]
        %v491 = vld [vmem:[%s4 + $0x70] sm:$0xff]
        %v492 = vld [vmem:[%s4 + $0x78] sm:$0xff]
        %v493 = vld [vmem:[%s4 + $0x80] sm:$0xff]
        %v494 = vld [vmem:[%s4 + $0x88] sm:$0xff]
        %v495 = vld [vmem:[%s4 + $0x90] sm:$0xff]
        %v496 = vld [vmem:[%s4 + $0x98] sm:$0xff]
        %v497 = vld [vmem:[%s4 + $0xa0] sm:$0xff]
        %v498 = vld [vmem:[%s4 + $0xa8] sm:$0xff]
        %v499 = vld [vmem:[%s4 + $0xb0] sm:$0xff]
        %v500 = vld [vmem:[%s4 + $0xb8] sm:$0xff]
        %v501 = vld [vmem:[%s4 + $0xc0] sm:$0xff]
        %v502 = vld [vmem:[%s4 + $0xc8] sm:$0xff]
        %v503 = vld [vmem:[%s4 + $0xd0] sm:$0xff]
        %v504 = vld [vmem:[%s4 + $0xd8] sm:$0xff]
        %v505 = vld [vmem:[%s4 + $0xe0] sm:$0xff]
        %v506 = vld [vmem:[%s4 + $0xe8] sm:$0xff]
        %v507 = vld [vmem:[%s4 + $0xf0] sm:$0xff]
        %v508 = vld [vmem:[%s4 + $0xf8] sm:$0xff]
        %510 = vset.pattern.permute.xlu0 0
        %511 = vperm.xlu0 %510, %v477
        %v512 = vpop.permute.xlu0 %511
        %515 = vset.pattern.permute.xlu0 0
        %516 = vperm.xlu0 %515, %v478
        %v517 = vpop.permute.xlu0 %516
        %520 = vset.pattern.permute.xlu0 0
        %521 = vperm.xlu0 %520, %v479
        %v522 = vpop.permute.xlu0 %521
        %525 = vset.pattern.permute.xlu0 0
        %526 = vperm.xlu0 %525, %v480
        %v527 = vpop.permute.xlu0 %526
        %530 = vset.pattern.permute.xlu0 0
        %531 = vperm.xlu0 %530, %v481
        %v532 = vpop.permute.xlu0 %531
        %535 = vset.pattern.permute.xlu0 0
        %536 = vperm.xlu0 %535, %v482
        %v537 = vpop.permute.xlu0 %536
        %540 = vset.pattern.permute.xlu0 0
        %541 = vperm.xlu0 %540, %v483
        %v542 = vpop.permute.xlu0 %541
        %545 = vset.pattern.permute.xlu0 0
        %546 = vperm.xlu0 %545, %v484
        %v547 = vpop.permute.xlu0 %546
        %550 = vset.pattern.permute.xlu0 0
        %551 = vperm.xlu0 %550, %v485
        %v552 = vpop.permute.xlu0 %551
        %555 = vset.pattern.permute.xlu0 0
        %556 = vperm.xlu0 %555, %v486
        %v557 = vpop.permute.xlu0 %556
        %560 = vset.pattern.permute.xlu0 0
        %561 = vperm.xlu0 %560, %v487
        %v562 = vpop.permute.xlu0 %561
        %565 = vset.pattern.permute.xlu0 0
        %566 = vperm.xlu0 %565, %v488
        %v567 = vpop.permute.xlu0 %566
        %570 = vset.pattern.permute.xlu0 0
        %571 = vperm.xlu0 %570, %v489
        %v572 = vpop.permute.xlu0 %571
        %575 = vset.pattern.permute.xlu0 0
        %576 = vperm.xlu0 %575, %v490
        %v577 = vpop.permute.xlu0 %576
        %580 = vset.pattern.permute.xlu0 0
        %581 = vperm.xlu0 %580, %v491
        %v582 = vpop.permute.xlu0 %581
        %585 = vset.pattern.permute.xlu0 0
        %586 = vperm.xlu0 %585, %v492
        %v587 = vpop.permute.xlu0 %586
        %590 = vset.pattern.permute.xlu0 0
        %591 = vperm.xlu0 %590, %v493
        %v592 = vpop.permute.xlu0 %591
        %595 = vset.pattern.permute.xlu0 0
        %596 = vperm.xlu0 %595, %v494
        %v597 = vpop.permute.xlu0 %596
        %600 = vset.pattern.permute.xlu0 0
        %601 = vperm.xlu0 %600, %v495
        %v602 = vpop.permute.xlu0 %601
        %605 = vset.pattern.permute.xlu0 0
        %606 = vperm.xlu0 %605, %v496
        %v607 = vpop.permute.xlu0 %606
        %610 = vset.pattern.permute.xlu0 0
        %611 = vperm.xlu0 %610, %v497
        %v612 = vpop.permute.xlu0 %611
        %615 = vset.pattern.permute.xlu0 0
        %616 = vperm.xlu0 %615, %v498
        %v617 = vpop.permute.xlu0 %616
        %620 = vset.pattern.permute.xlu0 0
        %621 = vperm.xlu0 %620, %v499
        %v622 = vpop.permute.xlu0 %621
        %625 = vset.pattern.permute.xlu0 0
        %626 = vperm.xlu0 %625, %v500
        %v627 = vpop.permute.xlu0 %626
        %630 = vset.pattern.permute.xlu0 0
        %631 = vperm.xlu0 %630, %v501
        %v632 = vpop.permute.xlu0 %631
        %635 = vset.pattern.permute.xlu0 0
        %636 = vperm.xlu0 %635, %v502
        %v637 = vpop.permute.xlu0 %636
        %640 = vset.pattern.permute.xlu0 0
        %641 = vperm.xlu0 %640, %v503
        %v642 = vpop.permute.xlu0 %641
        %645 = vset.pattern.permute.xlu0 0
        %646 = vperm.xlu0 %645, %v504
        %v647 = vpop.permute.xlu0 %646
        %650 = vset.pattern.permute.xlu0 0
        %651 = vperm.xlu0 %650, %v505
        %v652 = vpop.permute.xlu0 %651
        %655 = vset.pattern.permute.xlu0 0
        %656 = vperm.xlu0 %655, %v506
        %v657 = vpop.permute.xlu0 %656
        %660 = vset.pattern.permute.xlu0 0
        %661 = vperm.xlu0 %660, %v507
        %v662 = vpop.permute.xlu0 %661
        %665 = vset.pattern.permute.xlu0 0
        %666 = vperm.xlu0 %665, %v508
        %v667 = vpop.permute.xlu0 %666
        %669 = vmatpush.msra.mxu0 %v444
        %670 = vmatpush.msra.mxu0 %v443
        %671 = vmatpush.msra.mxu0 %v442
        %672 = vmatpush.msra.mxu0 %v441
        %673 = vmatpush.msra.mxu0 %v440
        %674 = vmatpush.msra.mxu0 %v439
        %675 = vmatpush.msra.mxu0 %v438
        %676 = vmatpush.msra.mxu0 %v437
        %677 = vmatpush.msra.mxu0 %v436
        %678 = vmatpush.msra.mxu0 %v435
        %679 = vmatpush.msra.mxu0 %v434
        %680 = vmatpush.msra.mxu0 %v433
        %681 = vmatpush.msra.mxu0 %v432
        %682 = vmatpush.msra.mxu0 %v431
        %683 = vmatpush.msra.mxu0 %v430
        %684 = vmatpush.msra.mxu0 %v429
        %685 = vmatmul.f32.gmra.mxu0 %v445
        %v686 = vpop.f32.mrf.mxu0
        %v687 = vadd.f32 %v512, %v686
        %688 = vmatmul.f32.gmra.mxu0 %v446
        %v689 = vpop.f32.mrf.mxu0
        %v690 = vadd.f32 %v517, %v689
        %691 = vmatmul.f32.gmra.mxu0 %v447
        %v692 = vpop.f32.mrf.mxu0
        %v693 = vadd.f32 %v522, %v692
        %694 = vmatmul.f32.gmra.mxu0 %v448
        %v695 = vpop.f32.mrf.mxu0
        %v696 = vadd.f32 %v527, %v695
        %697 = vmatmul.f32.gmra.mxu0 %v449
        %v698 = vpop.f32.mrf.mxu0
        %v699 = vadd.f32 %v532, %v698
        %700 = vmatmul.f32.gmra.mxu0 %v450
        %v701 = vpop.f32.mrf.mxu0
        %v702 = vadd.f32 %v537, %v701
        %703 = vmatmul.f32.gmra.mxu0 %v451
        %v704 = vpop.f32.mrf.mxu0
        %v705 = vadd.f32 %v542, %v704
        %706 = vmatmul.f32.gmra.mxu0 %v452
        %v707 = vpop.f32.mrf.mxu0
        %v708 = vadd.f32 %v547, %v707
        %709 = vmatmul.f32.gmra.mxu0 %v453
        %v710 = vpop.f32.mrf.mxu0
        %v711 = vadd.f32 %v552, %v710
        %712 = vmatmul.f32.gmra.mxu0 %v454
        %v713 = vpop.f32.mrf.mxu0
        %v714 = vadd.f32 %v557, %v713
        %715 = vmatmul.f32.gmra.mxu0 %v455
        %v716 = vpop.f32.mrf.mxu0
        %v717 = vadd.f32 %v562, %v716
        %718 = vmatmul.f32.gmra.mxu0 %v456
        %v719 = vpop.f32.mrf.mxu0
        %v720 = vadd.f32 %v567, %v719
        %721 = vmatmul.f32.gmra.mxu0 %v457
        %v722 = vpop.f32.mrf.mxu0
        %v723 = vadd.f32 %v572, %v722
        %724 = vmatmul.f32.gmra.mxu0 %v458
        %v725 = vpop.f32.mrf.mxu0
        %v726 = vadd.f32 %v577, %v725
        %727 = vmatmul.f32.gmra.mxu0 %v459
        %v728 = vpop.f32.mrf.mxu0
        %v729 = vadd.f32 %v582, %v728
        %730 = vmatmul.f32.gmra.mxu0 %v460
        %v731 = vpop.f32.mrf.mxu0
        %v732 = vadd.f32 %v587, %v731
        %733 = vmatmul.f32.gmra.mxu0 %v461
        %v734 = vpop.f32.mrf.mxu0
        %v735 = vadd.f32 %v592, %v734
        %736 = vmatmul.f32.gmra.mxu0 %v462
        %v737 = vpop.f32.mrf.mxu0
        %v738 = vadd.f32 %v597, %v737
        %739 = vmatmul.f32.gmra.mxu0 %v463
        %v740 = vpop.f32.mrf.mxu0
        %v741 = vadd.f32 %v602, %v740
        %742 = vmatmul.f32.gmra.mxu0 %v464
        %v743 = vpop.f32.mrf.mxu0
        %v744 = vadd.f32 %v607, %v743
        %745 = vmatmul.f32.gmra.mxu0 %v465
        %v746 = vpop.f32.mrf.mxu0
        %v747 = vadd.f32 %v612, %v746
        %748 = vmatmul.f32.gmra.mxu0 %v466
        %v749 = vpop.f32.mrf.mxu0
        %v750 = vadd.f32 %v617, %v749
        %751 = vmatmul.f32.gmra.mxu0 %v467
        %v752 = vpop.f32.mrf.mxu0
        %v753 = vadd.f32 %v622, %v752
        %754 = vmatmul.f32.gmra.mxu0 %v468
        %v755 = vpop.f32.mrf.mxu0
        %v756 = vadd.f32 %v627, %v755
        %757 = vmatmul.f32.gmra.mxu0 %v469
        %v758 = vpop.f32.mrf.mxu0
        %v759 = vadd.f32 %v632, %v758
        %760 = vmatmul.f32.gmra.mxu0 %v470
        %v761 = vpop.f32.mrf.mxu0
        %v762 = vadd.f32 %v637, %v761
        %763 = vmatmul.f32.gmra.mxu0 %v471
        %v764 = vpop.f32.mrf.mxu0
        %v765 = vadd.f32 %v642, %v764
        %766 = vmatmul.f32.gmra.mxu0 %v472
        %v767 = vpop.f32.mrf.mxu0
        %v768 = vadd.f32 %v647, %v767
        %769 = vmatmul.f32.gmra.mxu0 %v473
        %v770 = vpop.f32.mrf.mxu0
        %v771 = vadd.f32 %v652, %v770
        %772 = vmatmul.f32.gmra.mxu0 %v474
        %v773 = vpop.f32.mrf.mxu0
        %v774 = vadd.f32 %v657, %v773
        %775 = vmatmul.f32.gmra.mxu0 %v475
        %v776 = vpop.f32.mrf.mxu0
        %v777 = vadd.f32 %v662, %v776
        %778 = vmatmul.f32.gmra.mxu0 %v476
        %v779 = vpop.f32.mrf.mxu0
        %v780 = vadd.f32 %v667, %v779
        %781 = vdwg.mxu0
        %vm782 = vcmask 261120
        %783 = vst.msk [vmem:[%s217] sm:$0xff] %vm782, %v687
        %784 = vst.msk [vmem:[%s217 + $0x8] sm:$0xff] %vm782, %v690
        %785 = vst.msk [vmem:[%s217 + $0x10] sm:$0xff] %vm782, %v693
        %786 = vst.msk [vmem:[%s217 + $0x18] sm:$0xff] %vm782, %v696
        %787 = vst.msk [vmem:[%s217 + $0x20] sm:$0xff] %vm782, %v699
        %788 = vst.msk [vmem:[%s217 + $0x28] sm:$0xff] %vm782, %v702
        %789 = vst.msk [vmem:[%s217 + $0x30] sm:$0xff] %vm782, %v705
        %790 = vst.msk [vmem:[%s217 + $0x38] sm:$0xff] %vm782, %v708
        %791 = vst.msk [vmem:[%s217 + $0x40] sm:$0xff] %vm782, %v711
        %792 = vst.msk [vmem:[%s217 + $0x48] sm:$0xff] %vm782, %v714
        %793 = vst.msk [vmem:[%s217 + $0x50] sm:$0xff] %vm782, %v717
        %794 = vst.msk [vmem:[%s217 + $0x58] sm:$0xff] %vm782, %v720
        %795 = vst.msk [vmem:[%s217 + $0x60] sm:$0xff] %vm782, %v723
        %796 = vst.msk [vmem:[%s217 + $0x68] sm:$0xff] %vm782, %v726
        %797 = vst.msk [vmem:[%s217 + $0x70] sm:$0xff] %vm782, %v729
        %798 = vst.msk [vmem:[%s217 + $0x78] sm:$0xff] %vm782, %v732
        %799 = vst.msk [vmem:[%s217 + $0x80] sm:$0xff] %vm782, %v735
        %800 = vst.msk [vmem:[%s217 + $0x88] sm:$0xff] %vm782, %v738
        %801 = vst.msk [vmem:[%s217 + $0x90] sm:$0xff] %vm782, %v741
        %802 = vst.msk [vmem:[%s217 + $0x98] sm:$0xff] %vm782, %v744
        %803 = vst.msk [vmem:[%s217 + $0xa0] sm:$0xff] %vm782, %v747
        %804 = vst.msk [vmem:[%s217 + $0xa8] sm:$0xff] %vm782, %v750
        %805 = vst.msk [vmem:[%s217 + $0xb0] sm:$0xff] %vm782, %v753
        %806 = vst.msk [vmem:[%s217 + $0xb8] sm:$0xff] %vm782, %v756
        %807 = vst.msk [vmem:[%s217 + $0xc0] sm:$0xff] %vm782, %v759
        %808 = vst.msk [vmem:[%s217 + $0xc8] sm:$0xff] %vm782, %v762
        %809 = vst.msk [vmem:[%s217 + $0xd0] sm:$0xff] %vm782, %v765
        %810 = vst.msk [vmem:[%s217 + $0xd8] sm:$0xff] %vm782, %v768
        %811 = vst.msk [vmem:[%s217 + $0xe0] sm:$0xff] %vm782, %v771
        %812 = vst.msk [vmem:[%s217 + $0xe8] sm:$0xff] %vm782, %v774
        %813 = vst.msk [vmem:[%s217 + $0xf0] sm:$0xff] %vm782, %v777
        %814 = vst.msk [vmem:[%s217 + $0xf8] sm:$0xff] %vm782, %v780
        %s815 = sand.u32 %s137, 1
        %s816 = scalar_lea.sflag [#allocation3], %s815
        %s817 = sand.u32 %s137, 1
        %s818 = smul.addr %s817, 256
        %s819 = scalar_lea.vmem [#allocation2], %s818
        // Predicated region
        $region41: #{up_forward.1} parent=39 // pred_check
          %p820 = pneg %p147
        $region42: #{up_forward.1} parent=39 // pred_check_branch
          %822 = sbr.rel (%p820) target = $region44
        $region43: #{up_forward.1} parent=39 // pred_region
          %824 = vsyncadd %s816, 0
          %s825 = smul.addr %s19, 32
          %s826 = smul.addr %s825, 8
          %s827 = scalar_lea.hbm %s5, %s826
          %s828 = sshll.u32 %s819, 4
          %s829 = int_to_ptr.vmem [resolvable:$true] %s828
          %s830 = sshll.u32 %s827, 4
          %s831 = int_to_ptr.hbm [resolvable:$true] %s830
          %836 = dma.vmem_to_hbm [thread:$0]  %s829, 4096, %s831, %s816, 128, 128, 8
        $region44: #{up_forward.1} parent=39 // pred_fallthru
          _
      $region40: #{up_forward.1} parent=5 // pred_fallthru
        _
      %p837 = scmp.le.s32.totalorder 2, %s14
      // Predicated region
      $region45: #{up_forward.1} parent=5 // pred_check
        %p838 = pneg %p837
      $region46: #{up_forward.1} parent=5 // pred_check_branch
        %840 = sbr.rel (%p838) target = $region48
      $region47: #{up_forward.1} parent=5 // pred_region
        %s841 = ssub.s32 %s14, 2
        // Predicated region
        $region49: #{up_forward.1} parent=47 // pred_check
          %p842 = pneg %p153
        $region50: #{up_forward.1} parent=47 // pred_check_branch
          %844 = sbr.rel (%p842) target = $region52
        $region51: #{up_forward.1} parent=47 // pred_region
          %s845 = sand.u32 %s138, 1
          %s846 = scalar_lea.sflag [#allocation3], %s845
          %s847 = sand.u32 %s138, 1
          %s848 = smul.addr %s847, 256
          %s849 = scalar_lea.vmem [#allocation2], %s848
          %851 = dma.done %s846, 4096
        $region52: #{up_forward.1} parent=47 // pred_fallthru
          _
      $region48: #{up_forward.1} parent=5 // pred_fallthru
        _
    $region6: #{up_forward.1} parent=1 // loop_footer
      %s18 = sadd.s32 1, %s14
    $region7: #{up_forward.1} parent=1 // loop_footer_branch
      %13 = sbr.rel target = $region3
    $region8: #{up_forward.1} parent=1 // loop_exit
      _
    %852 = vsyncpa [#allocation3], 1
    %s853 = scalar_lea.sflag [#allocation3], 1
    %854 = vsyncpa %s853, 1

</llo_original>
